<compile_context>
chip_gen: v6e
topology: v6e:2x2x1
jax: 0.10.0
libtpu: 0.0.40
codegen_flags: <defaults>
</compile_context>

<pallas_src>
import jax
import jax.numpy as jnp
from jax.experimental import pallas as pl
from jax.experimental.pallas import tpu as pltpu


def rnn_kernel(x_ref, h0_ref, wt_ref, ut_ref, b_ref, wf_ref, out_ref):
    B = h0_ref.shape[0]
    T = x_ref.shape[0] // B

    # Hoisted input projection + bias: ONE MXU pass for all T timesteps.
    #   (T*B, I) @ (I, H) + (1, H)  ->  (T*B, H)
    xwb = jnp.dot(x_ref[...], wt_ref[...],
                  preferred_element_type=jnp.float32) + b_ref[...]

    ut = ut_ref[...]            # (H, H), read once, stays in vregs/VMEM
    h = h0_ref[...]             # (B, H)

    # Fully unrolled serial recurrence (T is a static trace-time constant);
    # only the dependent h @ U.T matmul remains on the critical path.
    for t in range(T):
        pre = xwb[t * B:(t + 1) * B, :] + jnp.dot(
            h, ut, preferred_element_type=jnp.float32)
        h = jnp.maximum(pre, 0.0)

    # Final projection with RNN.W: VPU multiply + cross-lane reduce (no MXU).
    out_ref[...] = jnp.sum(h * wf_ref[...], axis=-1, keepdims=True)   # (B, 1)


def rnn_forward(x, h0, W, U, b, w_final):
    """x: (T, B, I) f32; h0: (H,); W: (H, I); U: (H, H); b: (H,); w_final: (H,).
    Returns y: (B,) f32 — matches outputs[-1].matmul(self.W)."""
    T, B, I = x.shape
    H = W.shape[0]

    # All layout prep done once in the wrapper (XLA side):
    x2d = x.reshape(T * B, I).astype(jnp.float32)                 # (T*B, I)
    h0_b = jnp.broadcast_to(h0[None, :], (B, H)).astype(jnp.float32)
    wt = W.T.astype(jnp.float32)                                  # (I, H)
    ut = U.T.astype(jnp.float32)                                  # (H, H)
    bb = b.reshape(1, H).astype(jnp.float32)                      # (1, H)
    wf = w_final.reshape(1, H).astype(jnp.float32)                # (1, H)

    out = pl.pallas_call(
        rnn_kernel,
        out_shape=jax.ShapeDtypeStruct((B, 1), jnp.float32),
        grid_spec=pltpu.PrefetchScalarGridSpec(
            num_scalar_prefetch=0,
            grid=(1,),                      # single step: everything in VMEM at once
            in_specs=[
                pl.BlockSpec((T * B, I), lambda i: (0, 0)),   # x (all timesteps)
                pl.BlockSpec((B, H), lambda i: (0, 0)),       # h0 broadcast
                pl.BlockSpec((I, H), lambda i: (0, 0)),       # W.T
                pl.BlockSpec((H, H), lambda i: (0, 0)),       # U.T
                pl.BlockSpec((1, H), lambda i: (0, 0)),       # b
                pl.BlockSpec((1, H), lambda i: (0, 0)),       # final W (row)
            ],
            out_specs=pl.BlockSpec((B, 1), lambda i: (0, 0)),
        ),
        compiler_params=pltpu.CompilerParams(
            dimension_semantics=("arbitrary",),
        ),
    )(x2d, h0_b, wt, ut, bb, wf)

    return out[:, 0]


def rnn_reference(x, h0, W, U, b, w_final):
    """Pure-JAX reference mirroring the PyTorch loop."""
    B = x.shape[1]
    h = jnp.broadcast_to(h0[None, :], (B, W.shape[0]))
    for t in range(x.shape[0]):
        h = jax.nn.relu(x[t] @ W.T + h @ U.T + b)
    return h @ w_final


if __name__ == "__main__":
    # Small shapes consistent with the module: seq=8, batch=2, input=16, hidden=32.
    T, B, I, H = 8, 2, 16, 32

    key = jax.random.PRNGKey(0)
    k_x, k_h0, k_W, k_Wo, k_U, k_b, k_Wf = jax.random.split(key, 7)

    x = jax.random.normal(k_x, (T, B, I), dtype=jnp.float32)
    h0 = jax.random.normal(k_h0, (H,), dtype=jnp.float32)          # torch.randn(hidden_size)
    W = jax.random.normal(k_W, (H, I), dtype=jnp.float32) * 0.1    # cell.W
    Wo = jax.random.normal(k_Wo, (H, 1), dtype=jnp.float32) * 0.1  # cell.Wo (discarded by RNN.forward)
    U = jax.random.normal(k_U, (H, H), dtype=jnp.float32) * 0.1    # cell.U
    b = jax.random.normal(k_b, (H,), dtype=jnp.float32) * 0.1      # cell.b
    w_final = jax.random.normal(k_Wf, (H,), dtype=jnp.float32) * 0.1  # RNN.W

    y = rnn_forward(x, h0, W, U, b, w_final)
    y = jax.block_until_ready(y)

    y_ref = rnn_reference(x, h0, W, U, b, w_final)
    assert y.shape == (B,)
    assert jnp.allclose(y, y_ref, atol=1e-4, rtol=1e-4), (y, y_ref)

    print("KERNEL_OK")
</pallas_src>

<mosaic_0001>
module attributes {stable_mosaic.version = 11 : i64} {
  func.func @rnn_kernel(%arg0: i32, %arg1: memref<16x16xf32, #tpu.memory_space<vmem>>, %arg2: memref<2x32xf32, #tpu.memory_space<vmem>>, %arg3: memref<16x32xf32, #tpu.memory_space<vmem>>, %arg4: memref<32x32xf32, #tpu.memory_space<vmem>>, %arg5: memref<1x32xf32, #tpu.memory_space<vmem>>, %arg6: memref<1x32xf32, #tpu.memory_space<vmem>>, %arg7: memref<2x1xf32, #tpu.memory_space<vmem>>) attributes {dimension_semantics = [#tpu.dimension_semantics<arbitrary>], iteration_bounds = array<i64: 1>, scalar_prefetch = 0 : i64, scratch_operands = 0 : i64, tpu.core_type = #tpu.core_type<tc>, window_params = [{pipeline_mode = #tpu.pipeline_mode<synchronous>, transform_indices = @transform_0, window_bounds = array<i64: 16, 16>}, {pipeline_mode = #tpu.pipeline_mode<synchronous>, transform_indices = @transform_1, window_bounds = array<i64: 2, 32>}, {pipeline_mode = #tpu.pipeline_mode<synchronous>, transform_indices = @transform_2, window_bounds = array<i64: 16, 32>}, {pipeline_mode = #tpu.pipeline_mode<synchronous>, transform_indices = @transform_3, window_bounds = array<i64: 32, 32>}, {pipeline_mode = #tpu.pipeline_mode<synchronous>, transform_indices = @transform_4, window_bounds = array<i64: 1, 32>}, {pipeline_mode = #tpu.pipeline_mode<synchronous>, transform_indices = @transform_5, window_bounds = array<i64: 1, 32>}, {pipeline_mode = #tpu.pipeline_mode<synchronous>, transform_indices = @transform_6, window_bounds = array<i64: 2, 1>}]} {
    %c0 = arith.constant 0 : index
    %c0_0 = arith.constant 0 : index
    %0 = vector.load %arg1[%c0, %c0_0] : memref<16x16xf32, #tpu.memory_space<vmem>>, vector<16x16xf32>
    %c0_1 = arith.constant 0 : index
    %c0_2 = arith.constant 0 : index
    %1 = vector.load %arg3[%c0_1, %c0_2] : memref<16x32xf32, #tpu.memory_space<vmem>>, vector<16x32xf32>
    %cst = arith.constant dense<0.000000e+00> : vector<16x32xf32>
    %2 = tpu.matmul %0, %1, %cst {dimension_numbers = #tpu.dot_dimension_numbers<[1], [0], [0], [1], [0, 0, 1, 1], [], []>} : vector<16x16xf32>, vector<16x32xf32>, vector<16x32xf32> -> vector<16x32xf32>
    %c0_3 = arith.constant 0 : index
    %c0_4 = arith.constant 0 : index
    %3 = vector.load %arg5[%c0_3, %c0_4] : memref<1x32xf32, #tpu.memory_space<vmem>>, vector<1x32xf32>
    %4 = vector.broadcast %3 : vector<1x32xf32> to vector<16x32xf32>
    %5 = arith.addf %2, %4 : vector<16x32xf32>
    %c0_5 = arith.constant 0 : index
    %c0_6 = arith.constant 0 : index
    %6 = vector.load %arg4[%c0_5, %c0_6] : memref<32x32xf32, #tpu.memory_space<vmem>>, vector<32x32xf32>
    %c0_7 = arith.constant 0 : index
    %c0_8 = arith.constant 0 : index
    %7 = vector.load %arg2[%c0_7, %c0_8] : memref<2x32xf32, #tpu.memory_space<vmem>>, vector<2x32xf32>
    %8 = vector.extract_strided_slice %5 {offsets = [0, 0], sizes = [2, 32], strides = [1, 1]} : vector<16x32xf32> to vector<2x32xf32>
    %cst_9 = arith.constant dense<0.000000e+00> : vector<2x32xf32>
    %9 = tpu.matmul %7, %6, %cst_9 {dimension_numbers = #tpu.dot_dimension_numbers<[1], [0], [0], [1], [0, 0, 1, 1], [], []>} : vector<2x32xf32>, vector<32x32xf32>, vector<2x32xf32> -> vector<2x32xf32>
    %10 = arith.addf %8, %9 : vector<2x32xf32>
    %cst_10 = arith.constant 0.000000e+00 : f32
    %11 = vector.broadcast %cst_10 : f32 to vector<2x32xf32>
    %12 = arith.maximumf %10, %11 : vector<2x32xf32>
    %13 = vector.extract_strided_slice %5 {offsets = [2, 0], sizes = [2, 32], strides = [1, 1]} : vector<16x32xf32> to vector<2x32xf32>
    %cst_11 = arith.constant dense<0.000000e+00> : vector<2x32xf32>
    %14 = tpu.matmul %12, %6, %cst_11 {dimension_numbers = #tpu.dot_dimension_numbers<[1], [0], [0], [1], [0, 0, 1, 1], [], []>} : vector<2x32xf32>, vector<32x32xf32>, vector<2x32xf32> -> vector<2x32xf32>
    %15 = arith.addf %13, %14 : vector<2x32xf32>
    %cst_12 = arith.constant 0.000000e+00 : f32
    %16 = vector.broadcast %cst_12 : f32 to vector<2x32xf32>
    %17 = arith.maximumf %15, %16 : vector<2x32xf32>
    %18 = vector.extract_strided_slice %5 {offsets = [4, 0], sizes = [2, 32], strides = [1, 1]} : vector<16x32xf32> to vector<2x32xf32>
    %cst_13 = arith.constant dense<0.000000e+00> : vector<2x32xf32>
    %19 = tpu.matmul %17, %6, %cst_13 {dimension_numbers = #tpu.dot_dimension_numbers<[1], [0], [0], [1], [0, 0, 1, 1], [], []>} : vector<2x32xf32>, vector<32x32xf32>, vector<2x32xf32> -> vector<2x32xf32>
    %20 = arith.addf %18, %19 : vector<2x32xf32>
    %cst_14 = arith.constant 0.000000e+00 : f32
    %21 = vector.broadcast %cst_14 : f32 to vector<2x32xf32>
    %22 = arith.maximumf %20, %21 : vector<2x32xf32>
    %23 = vector.extract_strided_slice %5 {offsets = [6, 0], sizes = [2, 32], strides = [1, 1]} : vector<16x32xf32> to vector<2x32xf32>
    %cst_15 = arith.constant dense<0.000000e+00> : vector<2x32xf32>
    %24 = tpu.matmul %22, %6, %cst_15 {dimension_numbers = #tpu.dot_dimension_numbers<[1], [0], [0], [1], [0, 0, 1, 1], [], []>} : vector<2x32xf32>, vector<32x32xf32>, vector<2x32xf32> -> vector<2x32xf32>
    %25 = arith.addf %23, %24 : vector<2x32xf32>
    %cst_16 = arith.constant 0.000000e+00 : f32
    %26 = vector.broadcast %cst_16 : f32 to vector<2x32xf32>
    %27 = arith.maximumf %25, %26 : vector<2x32xf32>
    %28 = vector.extract_strided_slice %5 {offsets = [8, 0], sizes = [2, 32], strides = [1, 1]} : vector<16x32xf32> to vector<2x32xf32>
    %cst_17 = arith.constant dense<0.000000e+00> : vector<2x32xf32>
    %29 = tpu.matmul %27, %6, %cst_17 {dimension_numbers = #tpu.dot_dimension_numbers<[1], [0], [0], [1], [0, 0, 1, 1], [], []>} : vector<2x32xf32>, vector<32x32xf32>, vector<2x32xf32> -> vector<2x32xf32>
    %30 = arith.addf %28, %29 : vector<2x32xf32>
    %cst_18 = arith.constant 0.000000e+00 : f32
    %31 = vector.broadcast %cst_18 : f32 to vector<2x32xf32>
    %32 = arith.maximumf %30, %31 : vector<2x32xf32>
    %33 = vector.extract_strided_slice %5 {offsets = [10, 0], sizes = [2, 32], strides = [1, 1]} : vector<16x32xf32> to vector<2x32xf32>
    %cst_19 = arith.constant dense<0.000000e+00> : vector<2x32xf32>
    %34 = tpu.matmul %32, %6, %cst_19 {dimension_numbers = #tpu.dot_dimension_numbers<[1], [0], [0], [1], [0, 0, 1, 1], [], []>} : vector<2x32xf32>, vector<32x32xf32>, vector<2x32xf32> -> vector<2x32xf32>
    %35 = arith.addf %33, %34 : vector<2x32xf32>
    %cst_20 = arith.constant 0.000000e+00 : f32
    %36 = vector.broadcast %cst_20 : f32 to vector<2x32xf32>
    %37 = arith.maximumf %35, %36 : vector<2x32xf32>
    %38 = vector.extract_strided_slice %5 {offsets = [12, 0], sizes = [2, 32], strides = [1, 1]} : vector<16x32xf32> to vector<2x32xf32>
    %cst_21 = arith.constant dense<0.000000e+00> : vector<2x32xf32>
    %39 = tpu.matmul %37, %6, %cst_21 {dimension_numbers = #tpu.dot_dimension_numbers<[1], [0], [0], [1], [0, 0, 1, 1], [], []>} : vector<2x32xf32>, vector<32x32xf32>, vector<2x32xf32> -> vector<2x32xf32>
    %40 = arith.addf %38, %39 : vector<2x32xf32>
    %cst_22 = arith.constant 0.000000e+00 : f32
    %41 = vector.broadcast %cst_22 : f32 to vector<2x32xf32>
    %42 = arith.maximumf %40, %41 : vector<2x32xf32>
    %43 = vector.extract_strided_slice %5 {offsets = [14, 0], sizes = [2, 32], strides = [1, 1]} : vector<16x32xf32> to vector<2x32xf32>
    %cst_23 = arith.constant dense<0.000000e+00> : vector<2x32xf32>
    %44 = tpu.matmul %42, %6, %cst_23 {dimension_numbers = #tpu.dot_dimension_numbers<[1], [0], [0], [1], [0, 0, 1, 1], [], []>} : vector<2x32xf32>, vector<32x32xf32>, vector<2x32xf32> -> vector<2x32xf32>
    %45 = arith.addf %43, %44 : vector<2x32xf32>
    %cst_24 = arith.constant 0.000000e+00 : f32
    %46 = vector.broadcast %cst_24 : f32 to vector<2x32xf32>
    %47 = arith.maximumf %45, %46 : vector<2x32xf32>
    %c0_25 = arith.constant 0 : index
    %c0_26 = arith.constant 0 : index
    %48 = vector.load %arg6[%c0_25, %c0_26] : memref<1x32xf32, #tpu.memory_space<vmem>>, vector<1x32xf32>
    %49 = vector.broadcast %48 : vector<1x32xf32> to vector<2x32xf32>
    %50 = arith.mulf %47, %49 : vector<2x32xf32>
    %cst_27 = arith.constant dense<0.000000e+00> : vector<2xf32>
    %51 = vector.multi_reduction <add>, %50, %cst_27 [1] : vector<2x32xf32> to vector<2xf32>
    %52 = vector.shape_cast %51 : vector<2xf32> to vector<2x1xf32>
    %c0_28 = arith.constant 0 : index
    %c0_29 = arith.constant 0 : index
    %53 = vector.load %arg7[%c0_28, %c0_29] : memref<2x1xf32, #tpu.memory_space<vmem>>, vector<2x1xf32>
    tpu.vector_store %arg7[%c0_28, %c0_29], %52 {strides = array<i32>} : memref<2x1xf32, #tpu.memory_space<vmem>>, vector<2x1xf32>,
    return
  }
  func.func @transform_0(%arg0: i32) -> (i32, i32) {
    %c0_i32 = arith.constant 0 : i32
    %c0_i32_0 = arith.constant 0 : i32
    %c0_i32_1 = arith.constant 0 : i32
    return %c0_i32, %c0_i32_0 : i32, i32
  }
  func.func @transform_1(%arg0: i32) -> (i32, i32) {
    %c0_i32 = arith.constant 0 : i32
    %c0_i32_0 = arith.constant 0 : i32
    %c0_i32_1 = arith.constant 0 : i32
    return %c0_i32, %c0_i32_0 : i32, i32
  }
  func.func @transform_2(%arg0: i32) -> (i32, i32) {
    %c0_i32 = arith.constant 0 : i32
    %c0_i32_0 = arith.constant 0 : i32
    %c0_i32_1 = arith.constant 0 : i32
    return %c0_i32, %c0_i32_0 : i32, i32
  }
  func.func @transform_3(%arg0: i32) -> (i32, i32) {
    %c0_i32 = arith.constant 0 : i32
    %c0_i32_0 = arith.constant 0 : i32
    %c0_i32_1 = arith.constant 0 : i32
    return %c0_i32, %c0_i32_0 : i32, i32
  }
  func.func @transform_4(%arg0: i32) -> (i32, i32) {
    %c0_i32 = arith.constant 0 : i32
    %c0_i32_0 = arith.constant 0 : i32
    %c0_i32_1 = arith.constant 0 : i32
    return %c0_i32, %c0_i32_0 : i32, i32
  }
  func.func @transform_5(%arg0: i32) -> (i32, i32) {
    %c0_i32 = arith.constant 0 : i32
    %c0_i32_0 = arith.constant 0 : i32
    %c0_i32_1 = arith.constant 0 : i32
    return %c0_i32, %c0_i32_0 : i32, i32
  }
  func.func @transform_6(%arg0: i32) -> (i32, i32) {
    %c0_i32 = arith.constant 0 : i32
    %c0_i32_0 = arith.constant 0 : i32
    %c0_i32_1 = arith.constant 0 : i32
    return %c0_i32, %c0_i32_0 : i32, i32
  }
}

</mosaic_0001>

<llo_original>
// kernel: tpu_custom_call.1
$region0: #{tpu_custom_call.1}
  #allocation0 [shape = 'u32[]', space=smem, size = 0x4, offset = 0x4, fixed_abs, tag = 'smem constant byte address 0x4 - core index']
  #allocation1 [shape = 'u32[144,128]{1,0:T(1,128)}', space=vmem, size = 0x12000, scoped, tag = 'internal scratch']
  %s0 = inlined_call_operand.hbm [shape: f32[16,16], index: 0, kind: input, shape index: {}]
  %s1 = inlined_call_operand.hbm [shape: f32[2,32], index: 1, kind: input, shape index: {}]
  %s2 = inlined_call_operand.hbm [shape: f32[16,32], index: 2, kind: input, shape index: {}]
  %s3 = inlined_call_operand.hbm [shape: f32[32,32], index: 3, kind: input, shape index: {}]
  %s4 = inlined_call_operand.vmem [shape: f32[1,32], index: 4, kind: input, shape index: {}]
  %s5 = inlined_call_operand.vmem [shape: f32[1,32], index: 5, kind: input, shape index: {}]
  %s6 = inlined_call_operand.vmem [shape: f32[2,1], index: 6, kind: output, shape index: {}]
  %s7 = sld [smem:[#allocation0]]
  $region50: #{tpu_custom_call.1} parent=0
    _
  %s9 = ssub.s32 1, %s7
  %s10 = scalar_select 0, %s9, %s7
  $region1: #{tpu_custom_call.1} parent=0
    #allocation2 [shape = 'u8[8192]{0}', space=vmem, size = 0x2000, scoped, tag = 'input window, operand 0, single buffered']
    #allocation3 [shape = 's32[1]{0}', space=sflag, size = 0x4, scoped, tag = 'scoped memory for tpu_custom_call.1']
    #allocation4 [shape = 'u8[1024]{0}', space=vmem, size = 0x400, scoped, tag = 'input window, operand 1, single buffered']
    #allocation5 [shape = 's32[1]{0}', space=sflag, size = 0x4, scoped, tag = 'scoped memory for tpu_custom_call.1']
    #allocation6 [shape = 'u8[8192]{0}', space=vmem, size = 0x2000, scoped, tag = 'input window, operand 2, single buffered']
    #allocation7 [shape = 'u8[16384]{0}', space=vmem, size = 0x4000, scoped, tag = 'input window, operand 3, single buffered']
    #allocation8 [shape = 's32[1]{0}', space=sflag, size = 0x4, scoped, tag = 'scoped memory for tpu_custom_call.1']
    %11 = vsyncpa [#allocation3], 0
    %12 = vsyncpa [#allocation5], 0
    %13 = vsyncpa [#allocation8], 0
    // Predicated region
    $region2: #{tpu_custom_call.1} parent=1 // pred_check
      _
    $region3: #{tpu_custom_call.1} parent=1 // pred_check_branch
      %15 = sbr.rel (0) target = $region5
    $region4: #{tpu_custom_call.1} parent=1 // pred_region
      %s17 = ssub.s32 256, 256
      %18 = vsyncadd [#allocation3], %s17
      %s19 = sshll.u32 [#allocation2], 4
      %s20 = int_to_ptr.vmem [resolvable:$true] %s19
      %25 = dma.hbm_to_vmem [thread:$0]  %s0, 256, %s20, [#allocation3], 128, 128, 8
    $region5: #{tpu_custom_call.1} parent=1 // pred_fallthru
      _
    // Predicated region
    $region6: #{tpu_custom_call.1} parent=1 // pred_check
      _
    $region7: #{tpu_custom_call.1} parent=1 // pred_check_branch
      %27 = sbr.rel (0) target = $region9
    $region8: #{tpu_custom_call.1} parent=1 // pred_region
      %s29 = ssub.s32 32, 32
      %30 = vsyncadd [#allocation5], %s29
      %s32 = sshll.u32 [#allocation4], 4
      %s33 = int_to_ptr.vmem [resolvable:$true] %s32
      %35 = dma.hbm_to_vmem [thread:$0]  %s1, 32, %s33, [#allocation5]
    $region9: #{tpu_custom_call.1} parent=1 // pred_fallthru
      _
    // Predicated region
    $region10: #{tpu_custom_call.1} parent=1 // pred_check
      _
    $region11: #{tpu_custom_call.1} parent=1 // pred_check_branch
      %37 = sbr.rel (0) target = $region13
    $region12: #{tpu_custom_call.1} parent=1 // pred_region
      %s39 = ssub.s32 256, 256
      %40 = vsyncadd [#allocation5], %s39
      %s41 = sshll.u32 [#allocation6], 4
      %s42 = int_to_ptr.vmem [resolvable:$true] %s41
      %47 = dma.hbm_to_vmem [thread:$0]  %s2, 256, %s42, [#allocation5], 128, 128, 8
    $region13: #{tpu_custom_call.1} parent=1 // pred_fallthru
      _
    // Predicated region
    $region14: #{tpu_custom_call.1} parent=1 // pred_check
      _
    $region15: #{tpu_custom_call.1} parent=1 // pred_check_branch
      %49 = sbr.rel (0) target = $region17
    $region16: #{tpu_custom_call.1} parent=1 // pred_region
      %s51 = ssub.s32 512, 512
      %52 = vsyncadd [#allocation8], %s51
      %s53 = sshll.u32 [#allocation7], 4
      %s54 = int_to_ptr.vmem [resolvable:$true] %s53
      %59 = dma.hbm_to_vmem [thread:$0]  %s3, 512, %s54, [#allocation8], 128, 128, 8
    $region17: #{tpu_custom_call.1} parent=1 // pred_fallthru
      _
    // Predicated region
    $region18: #{tpu_custom_call.1} parent=1 // pred_check
      _
    $region19: #{tpu_custom_call.1} parent=1 // pred_check_branch
      %61 = sbr.rel (0) target = $region21
    $region20: #{tpu_custom_call.1} parent=1 // pred_region
      _
    $region21: #{tpu_custom_call.1} parent=1 // pred_fallthru
      _
    // Predicated region
    $region22: #{tpu_custom_call.1} parent=1 // pred_check
      _
    $region23: #{tpu_custom_call.1} parent=1 // pred_check_branch
      %63 = sbr.rel (0) target = $region25
    $region24: #{tpu_custom_call.1} parent=1 // pred_region
      _
    $region25: #{tpu_custom_call.1} parent=1 // pred_fallthru
      _
    // Predicated region
    $region26: #{tpu_custom_call.1} parent=1 // pred_check
      _
    $region27: #{tpu_custom_call.1} parent=1 // pred_check_branch
      %65 = sbr.rel (0) target = $region29
    $region28: #{tpu_custom_call.1} parent=1 // pred_region
      %66 = dma.done [#allocation3], 256
    $region29: #{tpu_custom_call.1} parent=1 // pred_fallthru
      _
    // Predicated region
    $region30: #{tpu_custom_call.1} parent=1 // pred_check
      _
    $region31: #{tpu_custom_call.1} parent=1 // pred_check_branch
      %68 = sbr.rel (0) target = $region33
    $region32: #{tpu_custom_call.1} parent=1 // pred_region
      %69 = dma.done [#allocation5], 32
    $region33: #{tpu_custom_call.1} parent=1 // pred_fallthru
      _
    // Predicated region
    $region34: #{tpu_custom_call.1} parent=1 // pred_check
      _
    $region35: #{tpu_custom_call.1} parent=1 // pred_check_branch
      %71 = sbr.rel (0) target = $region37
    $region36: #{tpu_custom_call.1} parent=1 // pred_region
      %72 = dma.done [#allocation5], 256
    $region37: #{tpu_custom_call.1} parent=1 // pred_fallthru
      _
    // Predicated region
    $region38: #{tpu_custom_call.1} parent=1 // pred_check
      _
    $region39: #{tpu_custom_call.1} parent=1 // pred_check_branch
      %74 = sbr.rel (0) target = $region41
    $region40: #{tpu_custom_call.1} parent=1 // pred_region
      %75 = dma.done [#allocation8], 512
    $region41: #{tpu_custom_call.1} parent=1 // pred_fallthru
      _
    %v76 = vld [vmem:[#allocation2] sm:$0xff]
    %v77 = vld [vmem:[#allocation2 + $0x8] sm:$0xff]
    %v78 = vld [vmem:[#allocation6] sm:$0xff]
    %v79 = vld [vmem:[#allocation6 + $0x8] sm:$0xff]
    %v80 = vld [vmem:[%s4] sm:$0x1]
    %v82 = vlaneseq
    %v83 = vshrl.u32 %v82, 7
    %v84 = vsub.s32 0, %v83
    %v85 = vrot.slane %v80, %v84
    %vm87 = vcmask 130048
    %v89 = vsel %vm87, %v76, 0
    %v92 = vsel %vm87, %v77, 0
    %94 = vmatprep.subr.mxu0 0.0
    %95 = vmatpush1.msra.mxu0 0.0
    %96 = vmatprep.subr.mxu0 0.0
    %97 = vmatpush1.msra.mxu0 0.0
    %98 = vmatprep.subr.mxu0 0.0
    %99 = vmatpush1.msra.mxu0 0.0
    %100 = vmatprep.subr.mxu0 0.0
    %101 = vmatpush1.msra.mxu0 0.0
    %102 = vmatprep.subr.mxu0 0.0
    %103 = vmatpush1.msra.mxu0 0.0
    %104 = vmatprep.subr.mxu0 0.0
    %105 = vmatpush1.msra.mxu0 0.0
    %106 = vmatprep.subr.mxu0 0.0
    %107 = vmatpush1.msra.mxu0 0.0
    %108 = vmatprep.subr.mxu0 0.0
    %109 = vmatpush1.msra.mxu0 0.0
    %110 = vmatprep.subr.mxu0 0.0
    %111 = vmatpush1.msra.mxu0 0.0
    %112 = vmatprep.subr.mxu0 0.0
    %113 = vmatpush1.msra.mxu0 0.0
    %114 = vmatprep.subr.mxu0 0.0
    %115 = vmatpush1.msra.mxu0 0.0
    %116 = vmatprep.subr.mxu0 0.0
    %117 = vmatpush1.msra.mxu0 0.0
    %118 = vmatprep.subr.mxu0 0.0
    %119 = vmatpush1.msra.mxu0 0.0
    %120 = vmatprep.subr.mxu0 0.0
    %121 = vmatpush1.msra.mxu0 0.0
    %122 = vmatprep.subr.mxu0 0.0
    %123 = vmatpush1.msra.mxu0 %v79
    %124 = vmatprep.subr.mxu0 0.0
    %125 = vmatpush1.msra.mxu0 %v78
    %126 = vmatprep.subr.mxu0 0.0
    %127 = vmatpush2.msra.mxu0 0.0
    %128 = vmatprep.subr.mxu0 0.0
    %129 = vmatpush2.msra.mxu0 0.0
    %130 = vmatprep.subr.mxu0 0.0
    %131 = vmatpush2.msra.mxu0 0.0
    %132 = vmatprep.subr.mxu0 0.0
    %133 = vmatpush2.msra.mxu0 0.0
    %134 = vmatprep.subr.mxu0 0.0
    %135 = vmatpush2.msra.mxu0 0.0
    %136 = vmatprep.subr.mxu0 0.0
    %137 = vmatpush2.msra.mxu0 0.0
    %138 = vmatprep.subr.mxu0 0.0
    %139 = vmatpush2.msra.mxu0 0.0
    %140 = vmatprep.subr.mxu0 0.0
    %141 = vmatpush2.msra.mxu0 0.0
    %142 = vmatprep.subr.mxu0 0.0
    %143 = vmatpush2.msra.mxu0 0.0
    %144 = vmatprep.subr.mxu0 0.0
    %145 = vmatpush2.msra.mxu0 0.0
    %146 = vmatprep.subr.mxu0 0.0
    %147 = vmatpush2.msra.mxu0 0.0
    %148 = vmatprep.subr.mxu0 0.0
    %149 = vmatpush2.msra.mxu0 0.0
    %150 = vmatprep.subr.mxu0 0.0
    %151 = vmatpush2.msra.mxu0 0.0
    %152 = vmatprep.subr.mxu0 0.0
    %153 = vmatpush2.msra.mxu0 0.0
    %154 = vmatprep.subr.mxu0 0.0
    %155 = vmatpush2.msra.mxu0 0.0
    %156 = vmatprep.subr.mxu0 0.0
    %157 = vmatpush2.msra.mxu0 0.0
    %158 = vmatprep.mubr.f32.mxu0 0.0
    %159 = vmatmul.mubr.f32.gmra.mxu0 %v89
    %v160 = vpop.f32.mrf.mxu0
    %v161 = vadd.f32 %v85, %v160
    %v162 = vpop.f32.mrf.mxu0
    %163 = vmatprep.mubr.f32.mxu0 0.0
    %164 = vmatmul.mubr.f32.gmra.mxu0 %v92
    %v165 = vpop.f32.mrf.mxu0
    %v166 = vadd.f32 %v85, %v165
    %v167 = vpop.f32.mrf.mxu0
    %168 = vdwg.mxu0
    %v169 = vld [vmem:[#allocation7] sm:$0xff]
    %v170 = vld [vmem:[#allocation7 + $0x8] sm:$0xff]
    %v171 = vld [vmem:[#allocation7 + $0x10] sm:$0xff]
    %v172 = vld [vmem:[#allocation7 + $0x18] sm:$0xff]
    %v173 = vld [vmem:[#allocation4] sm:$0x3]
    %vm174 = vcmask 261120
    %v176 = vsel %vm174, %v173, 0
    %178 = vmatprep.subr.mxu0 0.0
    %179 = vmatpush1.msra.mxu0 0.0
    %180 = vmatprep.subr.mxu0 0.0
    %181 = vmatpush1.msra.mxu0 0.0
    %182 = vmatprep.subr.mxu0 0.0
    %183 = vmatpush1.msra.mxu0 0.0
    %184 = vmatprep.subr.mxu0 0.0
    %185 = vmatpush1.msra.mxu0 0.0
    %186 = vmatprep.subr.mxu0 0.0
    %187 = vmatpush1.msra.mxu0 0.0
    %188 = vmatprep.subr.mxu0 0.0
    %189 = vmatpush1.msra.mxu0 0.0
    %190 = vmatprep.subr.mxu0 0.0
    %191 = vmatpush1.msra.mxu0 0.0
    %192 = vmatprep.subr.mxu0 0.0
    %193 = vmatpush1.msra.mxu0 0.0
    %194 = vmatprep.subr.mxu0 0.0
    %195 = vmatpush1.msra.mxu0 0.0
    %196 = vmatprep.subr.mxu0 0.0
    %197 = vmatpush1.msra.mxu0 0.0
    %198 = vmatprep.subr.mxu0 0.0
    %199 = vmatpush1.msra.mxu0 0.0
    %200 = vmatprep.subr.mxu0 0.0
    %201 = vmatpush1.msra.mxu0 0.0
    %202 = vmatprep.subr.mxu0 0.0
    %203 = vmatpush1.msra.mxu0 %v172
    %204 = vmatprep.subr.mxu0 0.0
    %205 = vmatpush1.msra.mxu0 %v171
    %206 = vmatprep.subr.mxu0 0.0
    %207 = vmatpush1.msra.mxu0 %v170
    %208 = vmatprep.subr.mxu0 0.0
    %209 = vmatpush1.msra.mxu0 %v169
    %210 = vmatprep.subr.mxu0 0.0
    %211 = vmatpush2.msra.mxu0 0.0
    %212 = vmatprep.subr.mxu0 0.0
    %213 = vmatpush2.msra.mxu0 0.0
    %214 = vmatprep.subr.mxu0 0.0
    %215 = vmatpush2.msra.mxu0 0.0
    %216 = vmatprep.subr.mxu0 0.0
    %217 = vmatpush2.msra.mxu0 0.0
    %218 = vmatprep.subr.mxu0 0.0
    %219 = vmatpush2.msra.mxu0 0.0
    %220 = vmatprep.subr.mxu0 0.0
    %221 = vmatpush2.msra.mxu0 0.0
    %222 = vmatprep.subr.mxu0 0.0
    %223 = vmatpush2.msra.mxu0 0.0
    %224 = vmatprep.subr.mxu0 0.0
    %225 = vmatpush2.msra.mxu0 0.0
    %226 = vmatprep.subr.mxu0 0.0
    %227 = vmatpush2.msra.mxu0 0.0
    %228 = vmatprep.subr.mxu0 0.0
    %229 = vmatpush2.msra.mxu0 0.0
    %230 = vmatprep.subr.mxu0 0.0
    %231 = vmatpush2.msra.mxu0 0.0
    %232 = vmatprep.subr.mxu0 0.0
    %233 = vmatpush2.msra.mxu0 0.0
    %234 = vmatprep.subr.mxu0 0.0
    %235 = vmatpush2.msra.mxu0 0.0
    %236 = vmatprep.subr.mxu0 0.0
    %237 = vmatpush2.msra.mxu0 0.0
    %238 = vmatprep.subr.mxu0 0.0
    %239 = vmatpush2.msra.mxu0 0.0
    %240 = vmatprep.subr.mxu0 0.0
    %241 = vmatpush2.msra.mxu0 0.0
    %242 = vmatprep.mubr.f32.mxu0 0.0
    %243 = vmatmul.mubr.f32.gmra.mxu0 %v176
    %v244 = vpop.f32.mrf.mxu0
    %v245 = vadd.f32 0.0, %v244
    %v246 = vpop.f32.mrf.mxu0
    %247 = vdwg.mxu0
    %v248 = vadd.f32 %v161, %v245
    %v249 = vmax.f32 %v248, 0.0
    %v251 = vsel %vm174, %v249, 0
    %253 = vmatprep.subr.mxu0 0.0
    %254 = vmatpush1.msra.mxu0 0.0
    %255 = vmatprep.subr.mxu0 0.0
    %256 = vmatpush1.msra.mxu0 0.0
    %257 = vmatprep.subr.mxu0 0.0
    %258 = vmatpush1.msra.mxu0 0.0
    %259 = vmatprep.subr.mxu0 0.0
    %260 = vmatpush1.msra.mxu0 0.0
    %261 = vmatprep.subr.mxu0 0.0
    %262 = vmatpush1.msra.mxu0 0.0
    %263 = vmatprep.subr.mxu0 0.0
    %264 = vmatpush1.msra.mxu0 0.0
    %265 = vmatprep.subr.mxu0 0.0
    %266 = vmatpush1.msra.mxu0 0.0
    %267 = vmatprep.subr.mxu0 0.0
    %268 = vmatpush1.msra.mxu0 0.0
    %269 = vmatprep.subr.mxu0 0.0
    %270 = vmatpush1.msra.mxu0 0.0
    %271 = vmatprep.subr.mxu0 0.0
    %272 = vmatpush1.msra.mxu0 0.0
    %273 = vmatprep.subr.mxu0 0.0
    %274 = vmatpush1.msra.mxu0 0.0
    %275 = vmatprep.subr.mxu0 0.0
    %276 = vmatpush1.msra.mxu0 0.0
    %277 = vmatprep.subr.mxu0 0.0
    %278 = vmatpush1.msra.mxu0 %v172
    %279 = vmatprep.subr.mxu0 0.0
    %280 = vmatpush1.msra.mxu0 %v171
    %281 = vmatprep.subr.mxu0 0.0
    %282 = vmatpush1.msra.mxu0 %v170
    %283 = vmatprep.subr.mxu0 0.0
    %284 = vmatpush1.msra.mxu0 %v169
    %285 = vmatprep.subr.mxu0 0.0
    %286 = vmatpush2.msra.mxu0 0.0
    %287 = vmatprep.subr.mxu0 0.0
    %288 = vmatpush2.msra.mxu0 0.0
    %289 = vmatprep.subr.mxu0 0.0
    %290 = vmatpush2.msra.mxu0 0.0
    %291 = vmatprep.subr.mxu0 0.0
    %292 = vmatpush2.msra.mxu0 0.0
    %293 = vmatprep.subr.mxu0 0.0
    %294 = vmatpush2.msra.mxu0 0.0
    %295 = vmatprep.subr.mxu0 0.0
    %296 = vmatpush2.msra.mxu0 0.0
    %297 = vmatprep.subr.mxu0 0.0
    %298 = vmatpush2.msra.mxu0 0.0
    %299 = vmatprep.subr.mxu0 0.0
    %300 = vmatpush2.msra.mxu0 0.0
    %301 = vmatprep.subr.mxu0 0.0
    %302 = vmatpush2.msra.mxu0 0.0
    %303 = vmatprep.subr.mxu0 0.0
    %304 = vmatpush2.msra.mxu0 0.0
    %305 = vmatprep.subr.mxu0 0.0
    %306 = vmatpush2.msra.mxu0 0.0
    %307 = vmatprep.subr.mxu0 0.0
    %308 = vmatpush2.msra.mxu0 0.0
    %309 = vmatprep.subr.mxu0 0.0
    %310 = vmatpush2.msra.mxu0 0.0
    %311 = vmatprep.subr.mxu0 0.0
    %312 = vmatpush2.msra.mxu0 0.0
    %313 = vmatprep.subr.mxu0 0.0
    %314 = vmatpush2.msra.mxu0 0.0
    %315 = vmatprep.subr.mxu0 0.0
    %316 = vmatpush2.msra.mxu0 0.0
    %317 = vmatprep.mubr.f32.mxu0 0.0
    %318 = vmatmul.mubr.f32.gmra.mxu0 %v251
    %v319 = vpop.f32.mrf.mxu0
    %v320 = vadd.f32 0.0, %v319
    %v321 = vpop.f32.mrf.mxu0
    %322 = vdwg.mxu0
    %v324 = vrot.slane %v320, 6
    %v326 = vadd.f32 %v161, %v324
    %v327 = vmax.f32 %v326, 0.0
    %v329 = vrot.slane %v327, 2
    %v330 = vsel %vm174, %v329, 0
    %332 = vmatprep.subr.mxu0 0.0
    %333 = vmatpush1.msra.mxu0 0.0
    %334 = vmatprep.subr.mxu0 0.0
    %335 = vmatpush1.msra.mxu0 0.0
    %336 = vmatprep.subr.mxu0 0.0
    %337 = vmatpush1.msra.mxu0 0.0
    %338 = vmatprep.subr.mxu0 0.0
    %339 = vmatpush1.msra.mxu0 0.0
    %340 = vmatprep.subr.mxu0 0.0
    %341 = vmatpush1.msra.mxu0 0.0
    %342 = vmatprep.subr.mxu0 0.0
    %343 = vmatpush1.msra.mxu0 0.0
    %344 = vmatprep.subr.mxu0 0.0
    %345 = vmatpush1.msra.mxu0 0.0
    %346 = vmatprep.subr.mxu0 0.0
    %347 = vmatpush1.msra.mxu0 0.0
    %348 = vmatprep.subr.mxu0 0.0
    %349 = vmatpush1.msra.mxu0 0.0
    %350 = vmatprep.subr.mxu0 0.0
    %351 = vmatpush1.msra.mxu0 0.0
    %352 = vmatprep.subr.mxu0 0.0
    %353 = vmatpush1.msra.mxu0 0.0
    %354 = vmatprep.subr.mxu0 0.0
    %355 = vmatpush1.msra.mxu0 0.0
    %356 = vmatprep.subr.mxu0 0.0
    %357 = vmatpush1.msra.mxu0 %v172
    %358 = vmatprep.subr.mxu0 0.0
    %359 = vmatpush1.msra.mxu0 %v171
    %360 = vmatprep.subr.mxu0 0.0
    %361 = vmatpush1.msra.mxu0 %v170
    %362 = vmatprep.subr.mxu0 0.0
    %363 = vmatpush1.msra.mxu0 %v169
    %364 = vmatprep.subr.mxu0 0.0
    %365 = vmatpush2.msra.mxu0 0.0
    %366 = vmatprep.subr.mxu0 0.0
    %367 = vmatpush2.msra.mxu0 0.0
    %368 = vmatprep.subr.mxu0 0.0
    %369 = vmatpush2.msra.mxu0 0.0
    %370 = vmatprep.subr.mxu0 0.0
    %371 = vmatpush2.msra.mxu0 0.0
    %372 = vmatprep.subr.mxu0 0.0
    %373 = vmatpush2.msra.mxu0 0.0
    %374 = vmatprep.subr.mxu0 0.0
    %375 = vmatpush2.msra.mxu0 0.0
    %376 = vmatprep.subr.mxu0 0.0
    %377 = vmatpush2.msra.mxu0 0.0
    %378 = vmatprep.subr.mxu0 0.0
    %379 = vmatpush2.msra.mxu0 0.0
    %380 = vmatprep.subr.mxu0 0.0
    %381 = vmatpush2.msra.mxu0 0.0
    %382 = vmatprep.subr.mxu0 0.0
    %383 = vmatpush2.msra.mxu0 0.0
    %384 = vmatprep.subr.mxu0 0.0
    %385 = vmatpush2.msra.mxu0 0.0
    %386 = vmatprep.subr.mxu0 0.0
    %387 = vmatpush2.msra.mxu0 0.0
    %388 = vmatprep.subr.mxu0 0.0
    %389 = vmatpush2.msra.mxu0 0.0
    %390 = vmatprep.subr.mxu0 0.0
    %391 = vmatpush2.msra.mxu0 0.0
    %392 = vmatprep.subr.mxu0 0.0
    %393 = vmatpush2.msra.mxu0 0.0
    %394 = vmatprep.subr.mxu0 0.0
    %395 = vmatpush2.msra.mxu0 0.0
    %396 = vmatprep.mubr.f32.mxu0 0.0
    %397 = vmatmul.mubr.f32.gmra.mxu0 %v330
    %v398 = vpop.f32.mrf.mxu0
    %v399 = vadd.f32 0.0, %v398
    %v400 = vpop.f32.mrf.mxu0
    %401 = vdwg.mxu0
    %v403 = vrot.slane %v399, 4
    %v405 = vadd.f32 %v161, %v403
    %v406 = vmax.f32 %v405, 0.0
    %v408 = vrot.slane %v406, 4
    %v409 = vsel %vm174, %v408, 0
    %411 = vmatprep.subr.mxu0 0.0
    %412 = vmatpush1.msra.mxu0 0.0
    %413 = vmatprep.subr.mxu0 0.0
    %414 = vmatpush1.msra.mxu0 0.0
    %415 = vmatprep.subr.mxu0 0.0
    %416 = vmatpush1.msra.mxu0 0.0
    %417 = vmatprep.subr.mxu0 0.0
    %418 = vmatpush1.msra.mxu0 0.0
    %419 = vmatprep.subr.mxu0 0.0
    %420 = vmatpush1.msra.mxu0 0.0
    %421 = vmatprep.subr.mxu0 0.0
    %422 = vmatpush1.msra.mxu0 0.0
    %423 = vmatprep.subr.mxu0 0.0
    %424 = vmatpush1.msra.mxu0 0.0
    %425 = vmatprep.subr.mxu0 0.0
    %426 = vmatpush1.msra.mxu0 0.0
    %427 = vmatprep.subr.mxu0 0.0
    %428 = vmatpush1.msra.mxu0 0.0
    %429 = vmatprep.subr.mxu0 0.0
    %430 = vmatpush1.msra.mxu0 0.0
    %431 = vmatprep.subr.mxu0 0.0
    %432 = vmatpush1.msra.mxu0 0.0
    %433 = vmatprep.subr.mxu0 0.0
    %434 = vmatpush1.msra.mxu0 0.0
    %435 = vmatprep.subr.mxu0 0.0
    %436 = vmatpush1.msra.mxu0 %v172
    %437 = vmatprep.subr.mxu0 0.0
    %438 = vmatpush1.msra.mxu0 %v171
    %439 = vmatprep.subr.mxu0 0.0
    %440 = vmatpush1.msra.mxu0 %v170
    %441 = vmatprep.subr.mxu0 0.0
    %442 = vmatpush1.msra.mxu0 %v169
    %443 = vmatprep.subr.mxu0 0.0
    %444 = vmatpush2.msra.mxu0 0.0
    %445 = vmatprep.subr.mxu0 0.0
    %446 = vmatpush2.msra.mxu0 0.0
    %447 = vmatprep.subr.mxu0 0.0
    %448 = vmatpush2.msra.mxu0 0.0
    %449 = vmatprep.subr.mxu0 0.0
    %450 = vmatpush2.msra.mxu0 0.0
    %451 = vmatprep.subr.mxu0 0.0
    %452 = vmatpush2.msra.mxu0 0.0
    %453 = vmatprep.subr.mxu0 0.0
    %454 = vmatpush2.msra.mxu0 0.0
    %455 = vmatprep.subr.mxu0 0.0
    %456 = vmatpush2.msra.mxu0 0.0
    %457 = vmatprep.subr.mxu0 0.0
    %458 = vmatpush2.msra.mxu0 0.0
    %459 = vmatprep.subr.mxu0 0.0
    %460 = vmatpush2.msra.mxu0 0.0
    %461 = vmatprep.subr.mxu0 0.0
    %462 = vmatpush2.msra.mxu0 0.0
    %463 = vmatprep.subr.mxu0 0.0
    %464 = vmatpush2.msra.mxu0 0.0
    %465 = vmatprep.subr.mxu0 0.0
    %466 = vmatpush2.msra.mxu0 0.0
    %467 = vmatprep.subr.mxu0 0.0
    %468 = vmatpush2.msra.mxu0 0.0
    %469 = vmatprep.subr.mxu0 0.0
    %470 = vmatpush2.msra.mxu0 0.0
    %471 = vmatprep.subr.mxu0 0.0
    %472 = vmatpush2.msra.mxu0 0.0
    %473 = vmatprep.subr.mxu0 0.0
    %474 = vmatpush2.msra.mxu0 0.0
    %475 = vmatprep.mubr.f32.mxu0 0.0
    %476 = vmatmul.mubr.f32.gmra.mxu0 %v409
    %v477 = vpop.f32.mrf.mxu0
    %v478 = vadd.f32 0.0, %v477
    %v479 = vpop.f32.mrf.mxu0
    %480 = vdwg.mxu0
    %v482 = vrot.slane %v478, 2
    %v484 = vadd.f32 %v161, %v482
    %v485 = vmax.f32 %v484, 0.0
    %v487 = vrot.slane %v485, 6
    %v488 = vsel %vm174, %v487, 0
    %490 = vmatprep.subr.mxu0 0.0
    %491 = vmatpush1.msra.mxu0 0.0
    %492 = vmatprep.subr.mxu0 0.0
    %493 = vmatpush1.msra.mxu0 0.0
    %494 = vmatprep.subr.mxu0 0.0
    %495 = vmatpush1.msra.mxu0 0.0
    %496 = vmatprep.subr.mxu0 0.0
    %497 = vmatpush1.msra.mxu0 0.0
    %498 = vmatprep.subr.mxu0 0.0
    %499 = vmatpush1.msra.mxu0 0.0
    %500 = vmatprep.subr.mxu0 0.0
    %501 = vmatpush1.msra.mxu0 0.0
    %502 = vmatprep.subr.mxu0 0.0
    %503 = vmatpush1.msra.mxu0 0.0
    %504 = vmatprep.subr.mxu0 0.0
    %505 = vmatpush1.msra.mxu0 0.0
    %506 = vmatprep.subr.mxu0 0.0
    %507 = vmatpush1.msra.mxu0 0.0
    %508 = vmatprep.subr.mxu0 0.0
    %509 = vmatpush1.msra.mxu0 0.0
    %510 = vmatprep.subr.mxu0 0.0
    %511 = vmatpush1.msra.mxu0 0.0
    %512 = vmatprep.subr.mxu0 0.0
    %513 = vmatpush1.msra.mxu0 0.0
    %514 = vmatprep.subr.mxu0 0.0
    %515 = vmatpush1.msra.mxu0 %v172
    %516 = vmatprep.subr.mxu0 0.0
    %517 = vmatpush1.msra.mxu0 %v171
    %518 = vmatprep.subr.mxu0 0.0
    %519 = vmatpush1.msra.mxu0 %v170
    %520 = vmatprep.subr.mxu0 0.0
    %521 = vmatpush1.msra.mxu0 %v169
    %522 = vmatprep.subr.mxu0 0.0
    %523 = vmatpush2.msra.mxu0 0.0
    %524 = vmatprep.subr.mxu0 0.0
    %525 = vmatpush2.msra.mxu0 0.0
    %526 = vmatprep.subr.mxu0 0.0
    %527 = vmatpush2.msra.mxu0 0.0
    %528 = vmatprep.subr.mxu0 0.0
    %529 = vmatpush2.msra.mxu0 0.0
    %530 = vmatprep.subr.mxu0 0.0
    %531 = vmatpush2.msra.mxu0 0.0
    %532 = vmatprep.subr.mxu0 0.0
    %533 = vmatpush2.msra.mxu0 0.0
    %534 = vmatprep.subr.mxu0 0.0
    %535 = vmatpush2.msra.mxu0 0.0
    %536 = vmatprep.subr.mxu0 0.0
    %537 = vmatpush2.msra.mxu0 0.0
    %538 = vmatprep.subr.mxu0 0.0
    %539 = vmatpush2.msra.mxu0 0.0
    %540 = vmatprep.subr.mxu0 0.0
    %541 = vmatpush2.msra.mxu0 0.0
    %542 = vmatprep.subr.mxu0 0.0
    %543 = vmatpush2.msra.mxu0 0.0
    %544 = vmatprep.subr.mxu0 0.0
    %545 = vmatpush2.msra.mxu0 0.0
    %546 = vmatprep.subr.mxu0 0.0
    %547 = vmatpush2.msra.mxu0 0.0
    %548 = vmatprep.subr.mxu0 0.0
    %549 = vmatpush2.msra.mxu0 0.0
    %550 = vmatprep.subr.mxu0 0.0
    %551 = vmatpush2.msra.mxu0 0.0
    %552 = vmatprep.subr.mxu0 0.0
    %553 = vmatpush2.msra.mxu0 0.0
    %554 = vmatprep.mubr.f32.mxu0 0.0
    %555 = vmatmul.mubr.f32.gmra.mxu0 %v488
    %v556 = vpop.f32.mrf.mxu0
    %v557 = vadd.f32 0.0, %v556
    %v558 = vpop.f32.mrf.mxu0
    %559 = vdwg.mxu0
    %v560 = vadd.f32 %v166, %v557
    %v561 = vmax.f32 %v560, 0.0
    %v563 = vsel %vm174, %v561, 0
    %565 = vmatprep.subr.mxu0 0.0
    %566 = vmatpush1.msra.mxu0 0.0
    %567 = vmatprep.subr.mxu0 0.0
    %568 = vmatpush1.msra.mxu0 0.0
    %569 = vmatprep.subr.mxu0 0.0
    %570 = vmatpush1.msra.mxu0 0.0
    %571 = vmatprep.subr.mxu0 0.0
    %572 = vmatpush1.msra.mxu0 0.0
    %573 = vmatprep.subr.mxu0 0.0
    %574 = vmatpush1.msra.mxu0 0.0
    %575 = vmatprep.subr.mxu0 0.0
    %576 = vmatpush1.msra.mxu0 0.0
    %577 = vmatprep.subr.mxu0 0.0
    %578 = vmatpush1.msra.mxu0 0.0
    %579 = vmatprep.subr.mxu0 0.0
    %580 = vmatpush1.msra.mxu0 0.0
    %581 = vmatprep.subr.mxu0 0.0
    %582 = vmatpush1.msra.mxu0 0.0
    %583 = vmatprep.subr.mxu0 0.0
    %584 = vmatpush1.msra.mxu0 0.0
    %585 = vmatprep.subr.mxu0 0.0
    %586 = vmatpush1.msra.mxu0 0.0
    %587 = vmatprep.subr.mxu0 0.0
    %588 = vmatpush1.msra.mxu0 0.0
    %589 = vmatprep.subr.mxu0 0.0
    %590 = vmatpush1.msra.mxu0 %v172
    %591 = vmatprep.subr.mxu0 0.0
    %592 = vmatpush1.msra.mxu0 %v171
    %593 = vmatprep.subr.mxu0 0.0
    %594 = vmatpush1.msra.mxu0 %v170
    %595 = vmatprep.subr.mxu0 0.0
    %596 = vmatpush1.msra.mxu0 %v169
    %597 = vmatprep.subr.mxu0 0.0
    %598 = vmatpush2.msra.mxu0 0.0
    %599 = vmatprep.subr.mxu0 0.0
    %600 = vmatpush2.msra.mxu0 0.0
    %601 = vmatprep.subr.mxu0 0.0
    %602 = vmatpush2.msra.mxu0 0.0
    %603 = vmatprep.subr.mxu0 0.0
    %604 = vmatpush2.msra.mxu0 0.0
    %605 = vmatprep.subr.mxu0 0.0
    %606 = vmatpush2.msra.mxu0 0.0
    %607 = vmatprep.subr.mxu0 0.0
    %608 = vmatpush2.msra.mxu0 0.0
    %609 = vmatprep.subr.mxu0 0.0
    %610 = vmatpush2.msra.mxu0 0.0
    %611 = vmatprep.subr.mxu0 0.0
    %612 = vmatpush2.msra.mxu0 0.0
    %613 = vmatprep.subr.mxu0 0.0
    %614 = vmatpush2.msra.mxu0 0.0
    %615 = vmatprep.subr.mxu0 0.0
    %616 = vmatpush2.msra.mxu0 0.0
    %617 = vmatprep.subr.mxu0 0.0
    %618 = vmatpush2.msra.mxu0 0.0
    %619 = vmatprep.subr.mxu0 0.0
    %620 = vmatpush2.msra.mxu0 0.0
    %621 = vmatprep.subr.mxu0 0.0
    %622 = vmatpush2.msra.mxu0 0.0
    %623 = vmatprep.subr.mxu0 0.0
    %624 = vmatpush2.msra.mxu0 0.0
    %625 = vmatprep.subr.mxu0 0.0
    %626 = vmatpush2.msra.mxu0 0.0
    %627 = vmatprep.subr.mxu0 0.0
    %628 = vmatpush2.msra.mxu0 0.0
    %629 = vmatprep.mubr.f32.mxu0 0.0
    %630 = vmatmul.mubr.f32.gmra.mxu0 %v563
    %v631 = vpop.f32.mrf.mxu0
    %v632 = vadd.f32 0.0, %v631
    %v633 = vpop.f32.mrf.mxu0
    %634 = vdwg.mxu0
    %v636 = vrot.slane %v632, 6
    %v638 = vadd.f32 %v166, %v636
    %v639 = vmax.f32 %v638, 0.0
    %v641 = vrot.slane %v639, 2
    %v642 = vsel %vm174, %v641, 0
    %644 = vmatprep.subr.mxu0 0.0
    %645 = vmatpush1.msra.mxu0 0.0
    %646 = vmatprep.subr.mxu0 0.0
    %647 = vmatpush1.msra.mxu0 0.0
    %648 = vmatprep.subr.mxu0 0.0
    %649 = vmatpush1.msra.mxu0 0.0
    %650 = vmatprep.subr.mxu0 0.0
    %651 = vmatpush1.msra.mxu0 0.0
    %652 = vmatprep.subr.mxu0 0.0
    %653 = vmatpush1.msra.mxu0 0.0
    %654 = vmatprep.subr.mxu0 0.0
    %655 = vmatpush1.msra.mxu0 0.0
    %656 = vmatprep.subr.mxu0 0.0
    %657 = vmatpush1.msra.mxu0 0.0
    %658 = vmatprep.subr.mxu0 0.0
    %659 = vmatpush1.msra.mxu0 0.0
    %660 = vmatprep.subr.mxu0 0.0
    %661 = vmatpush1.msra.mxu0 0.0
    %662 = vmatprep.subr.mxu0 0.0
    %663 = vmatpush1.msra.mxu0 0.0
    %664 = vmatprep.subr.mxu0 0.0
    %665 = vmatpush1.msra.mxu0 0.0
    %666 = vmatprep.subr.mxu0 0.0
    %667 = vmatpush1.msra.mxu0 0.0
    %668 = vmatprep.subr.mxu0 0.0
    %669 = vmatpush1.msra.mxu0 %v172
    %670 = vmatprep.subr.mxu0 0.0
    %671 = vmatpush1.msra.mxu0 %v171
    %672 = vmatprep.subr.mxu0 0.0
    %673 = vmatpush1.msra.mxu0 %v170
    %674 = vmatprep.subr.mxu0 0.0
    %675 = vmatpush1.msra.mxu0 %v169
    %676 = vmatprep.subr.mxu0 0.0
    %677 = vmatpush2.msra.mxu0 0.0
    %678 = vmatprep.subr.mxu0 0.0
    %679 = vmatpush2.msra.mxu0 0.0
    %680 = vmatprep.subr.mxu0 0.0
    %681 = vmatpush2.msra.mxu0 0.0
    %682 = vmatprep.subr.mxu0 0.0
    %683 = vmatpush2.msra.mxu0 0.0
    %684 = vmatprep.subr.mxu0 0.0
    %685 = vmatpush2.msra.mxu0 0.0
    %686 = vmatprep.subr.mxu0 0.0
    %687 = vmatpush2.msra.mxu0 0.0
    %688 = vmatprep.subr.mxu0 0.0
    %689 = vmatpush2.msra.mxu0 0.0
    %690 = vmatprep.subr.mxu0 0.0
    %691 = vmatpush2.msra.mxu0 0.0
    %692 = vmatprep.subr.mxu0 0.0
    %693 = vmatpush2.msra.mxu0 0.0
    %694 = vmatprep.subr.mxu0 0.0
    %695 = vmatpush2.msra.mxu0 0.0
    %696 = vmatprep.subr.mxu0 0.0
    %697 = vmatpush2.msra.mxu0 0.0
    %698 = vmatprep.subr.mxu0 0.0
    %699 = vmatpush2.msra.mxu0 0.0
    %700 = vmatprep.subr.mxu0 0.0
    %701 = vmatpush2.msra.mxu0 0.0
    %702 = vmatprep.subr.mxu0 0.0
    %703 = vmatpush2.msra.mxu0 0.0
    %704 = vmatprep.subr.mxu0 0.0
    %705 = vmatpush2.msra.mxu0 0.0
    %706 = vmatprep.subr.mxu0 0.0
    %707 = vmatpush2.msra.mxu0 0.0
    %708 = vmatprep.mubr.f32.mxu0 0.0
    %709 = vmatmul.mubr.f32.gmra.mxu0 %v642
    %v710 = vpop.f32.mrf.mxu0
    %v711 = vadd.f32 0.0, %v710
    %v712 = vpop.f32.mrf.mxu0
    %713 = vdwg.mxu0
    %v715 = vrot.slane %v711, 4
    %v717 = vadd.f32 %v166, %v715
    %v718 = vmax.f32 %v717, 0.0
    %v720 = vrot.slane %v718, 4
    %v721 = vsel %vm174, %v720, 0
    %723 = vmatprep.subr.mxu0 0.0
    %724 = vmatpush1.msra.mxu0 0.0
    %725 = vmatprep.subr.mxu0 0.0
    %726 = vmatpush1.msra.mxu0 0.0
    %727 = vmatprep.subr.mxu0 0.0
    %728 = vmatpush1.msra.mxu0 0.0
    %729 = vmatprep.subr.mxu0 0.0
    %730 = vmatpush1.msra.mxu0 0.0
    %731 = vmatprep.subr.mxu0 0.0
    %732 = vmatpush1.msra.mxu0 0.0
    %733 = vmatprep.subr.mxu0 0.0
    %734 = vmatpush1.msra.mxu0 0.0
    %735 = vmatprep.subr.mxu0 0.0
    %736 = vmatpush1.msra.mxu0 0.0
    %737 = vmatprep.subr.mxu0 0.0
    %738 = vmatpush1.msra.mxu0 0.0
    %739 = vmatprep.subr.mxu0 0.0
    %740 = vmatpush1.msra.mxu0 0.0
    %741 = vmatprep.subr.mxu0 0.0
    %742 = vmatpush1.msra.mxu0 0.0
    %743 = vmatprep.subr.mxu0 0.0
    %744 = vmatpush1.msra.mxu0 0.0
    %745 = vmatprep.subr.mxu0 0.0
    %746 = vmatpush1.msra.mxu0 0.0
    %747 = vmatprep.subr.mxu0 0.0
    %748 = vmatpush1.msra.mxu0 %v172
    %749 = vmatprep.subr.mxu0 0.0
    %750 = vmatpush1.msra.mxu0 %v171
    %751 = vmatprep.subr.mxu0 0.0
    %752 = vmatpush1.msra.mxu0 %v170
    %753 = vmatprep.subr.mxu0 0.0
    %754 = vmatpush1.msra.mxu0 %v169
    %755 = vmatprep.subr.mxu0 0.0
    %756 = vmatpush2.msra.mxu0 0.0
    %757 = vmatprep.subr.mxu0 0.0
    %758 = vmatpush2.msra.mxu0 0.0
    %759 = vmatprep.subr.mxu0 0.0
    %760 = vmatpush2.msra.mxu0 0.0
    %761 = vmatprep.subr.mxu0 0.0
    %762 = vmatpush2.msra.mxu0 0.0
    %763 = vmatprep.subr.mxu0 0.0
    %764 = vmatpush2.msra.mxu0 0.0
    %765 = vmatprep.subr.mxu0 0.0
    %766 = vmatpush2.msra.mxu0 0.0
    %767 = vmatprep.subr.mxu0 0.0
    %768 = vmatpush2.msra.mxu0 0.0
    %769 = vmatprep.subr.mxu0 0.0
    %770 = vmatpush2.msra.mxu0 0.0
    %771 = vmatprep.subr.mxu0 0.0
    %772 = vmatpush2.msra.mxu0 0.0
    %773 = vmatprep.subr.mxu0 0.0
    %774 = vmatpush2.msra.mxu0 0.0
    %775 = vmatprep.subr.mxu0 0.0
    %776 = vmatpush2.msra.mxu0 0.0
    %777 = vmatprep.subr.mxu0 0.0
    %778 = vmatpush2.msra.mxu0 0.0
    %779 = vmatprep.subr.mxu0 0.0
    %780 = vmatpush2.msra.mxu0 0.0
    %781 = vmatprep.subr.mxu0 0.0
    %782 = vmatpush2.msra.mxu0 0.0
    %783 = vmatprep.subr.mxu0 0.0
    %784 = vmatpush2.msra.mxu0 0.0
    %785 = vmatprep.subr.mxu0 0.0
    %786 = vmatpush2.msra.mxu0 0.0
    %787 = vmatprep.mubr.f32.mxu0 0.0
    %788 = vmatmul.mubr.f32.gmra.mxu0 %v721
    %v789 = vpop.f32.mrf.mxu0
    %v790 = vadd.f32 0.0, %v789
    %v791 = vpop.f32.mrf.mxu0
    %792 = vdwg.mxu0
    %v794 = vrot.slane %v790, 2
    %v796 = vadd.f32 %v166, %v794
    %v797 = vmax.f32 %v796, 0.0
    %v798 = vld [vmem:[%s5] sm:$0x1]
    %v800 = vlaneseq
    %v801 = vshrl.u32 %v800, 7
    %v802 = vsub.s32 0, %v801
    %v803 = vrot.slane %v798, %v802
    %v805 = vmul.f32 %v797, %v803
    %vm806 = vcmask 261126
    %v807 = vsel %vm806, %v805, 0.0
    %808 = vadd.xlane.f32.xlu0 %v807
    %v809 = vpop.xlane.xlu0 %808
    %vm810 = vcmask 7174
    %811 = vst.msk [vmem:[%s6 - $0x6] sm:$0xc0] %vm810, %v809
    // Predicated region
    $region42: #{tpu_custom_call.1} parent=1 // pred_check
      _
    $region43: #{tpu_custom_call.1} parent=1 // pred_check_branch
      %813 = sbr.rel (0) target = $region45
    $region44: #{tpu_custom_call.1} parent=1 // pred_region
      _
    $region45: #{tpu_custom_call.1} parent=1 // pred_fallthru
      _
    // Predicated region
    $region46: #{tpu_custom_call.1} parent=1 // pred_check
      _
    $region47: #{tpu_custom_call.1} parent=1 // pred_check_branch
      %815 = sbr.rel (0) target = $region49
    $region48: #{tpu_custom_call.1} parent=1 // pred_region
      _
    $region49: #{tpu_custom_call.1} parent=1 // pred_fallthru
      _
    %816 = vsyncpa [#allocation3], 1
    %817 = vsyncpa [#allocation5], 1
    %818 = vsyncpa [#allocation8], 1

</llo_original>
